<compile_context>
chip_gen: v5e
topology: v5e:2x2
jax: 0.10.0
libtpu: 0.0.40
codegen_flags: <defaults>
</compile_context>

<pallas_src>
import math

import jax
import jax.numpy as jnp
from jax.experimental import pallas as pl
from jax.experimental.pallas import tpu as pltpu


_INV_SQRT2 = 0.7071067811865476
_SUBLANE = 8
_LANE = 128


def _cdiv(a, b):
    return -(-a // b)


def _round_up(v, g):
    return _cdiv(v, g) * g


def _round_down(v, g):
    return (v // g) * g


def _erf_f32(x):
    """erf approximation (Abramowitz & Stegun 7.1.26), |err| <= 1.5e-7.

    Uses only abs/select/mul/add/div/exp so it lowers cleanly on the VPU/EUP."""
    a1 = 0.254829592
    a2 = -0.284496736
    a3 = 1.421413741
    a4 = -1.453152027
    a5 = 1.061405429
    p = 0.3275911
    s = jnp.where(x < 0.0, -1.0, 1.0)
    ax = jnp.abs(x)
    t = 1.0 / (1.0 + p * ax)
    poly = ((((a5 * t + a4) * t + a3) * t + a2) * t + a1) * t
    return s * (1.0 - poly * jnp.exp(-ax * ax))


def _mae_head_kernel(x_ref, w1_ref, b1_ref, w2_ref, b2_ref, o_ref):
    # x_ref:  (TM, D_in)     activations (caller dtype; cast to bf16 below)
    # w1_ref: (D_in, D_h)    first linear weight, pre-transposed, bf16
    # b1_ref: (1, D_h)       f32
    # w2_ref: (D_h, D_out)   second linear weight, pre-transposed, bf16
    # b2_ref: (1, D_out)     f32
    # o_ref:  (TM, D_out)
    x = x_ref[...].astype(w1_ref.dtype)                        # bf16 for the MXU
    h = jnp.dot(x, w1_ref[...], preferred_element_type=jnp.float32)
    h = h + b1_ref[...]
    # exact (erf-based) GELU, matching torch.nn.GELU() default, in f32
    h = 0.5 * h * (1.0 + _erf_f32(h * _INV_SQRT2))
    h = h.astype(w2_ref.dtype)                                  # bf16 for the MXU
    out = jnp.dot(h, w2_ref[...], preferred_element_type=jnp.float32)
    out = out + b2_ref[...]
    o_ref[...] = out.astype(o_ref.dtype)


def _tpu_sizing():
    """Returns (vmem_budget_bytes, vmem_limit_bytes, num_tensorcores, target_rows)."""
    kind = ""
    try:
        kind = jax.devices()[0].device_kind.lower()
    except Exception:
        pass
    vmem_cap = None
    try:
        vmem_cap = int(pltpu.get_tpu_info().vmem_capacity_bytes)
    except Exception:
        pass

    is_v7_or_newer = ("v7" in kind) or (
        vmem_cap is not None and vmem_cap <= (64 << 20))
    is_known_big_vmem = (not is_v7_or_newer) and (
        (vmem_cap is not None and vmem_cap >= (128 << 20))
        or ("v5" in kind) or ("v6" in kind))

    if is_known_big_vmem:
        # v5e / v6e: 128 MiB VMEM, single TensorCore -> big row tiles, no split.
        return 96 << 20, 104 << 20, 1, 2048
    # v7x (64 MiB VMEM per TC, 2 TCs) or unknown hardware: conservative sizing.
    return 40 << 20, 48 << 20, 2, 512


def _pick_tile_rows(m, d_in, d_h, d_out, x_item, out_item, w_item, *,
                    vmem_budget, num_tc, target):
    """Largest legal row tile under the VMEM budget, TensorCore-balance aware."""
    # Resident operands, accounted double-buffered (the BlockSpec pipeline keeps
    # two buffers per input even with a constant index_map).
    fixed = 2 * ((d_in * d_h + d_h * d_out) * w_item + 4 * (d_h + d_out))
    # Per-row streaming cost: x tile + out tile (double-buffered) plus the
    # f32/bf16 hidden-activation intermediates and the bf16 copy of x.
    per_row = (2 * d_in * x_item + 2 * d_out * out_item
               + 2 * d_in + 6 * d_h)
    if fixed + _SUBLANE * per_row > vmem_budget:
        # TODO(synk): add a K-tiled (streaming-weights) fallback for decoder
        # dims whose resident weights do not fit the VMEM budget.
        raise ValueError(
            "MAEPredictionHead resident weights (~%d MiB double-buffered) exceed "
            "the VMEM budget (%d MiB); K-tiled streaming path not implemented."
            % (fixed >> 20, vmem_budget >> 20))
    cap = (vmem_budget - fixed) // max(per_row, 1)

    tm = int(min(m, cap, target))
    if tm < m:
        # MXU-friendly granularity (multiple of 256, hence also 128) when rows
        # are plentiful, else sublane granularity. tm == m (full extent) is
        # always a legal block shape.
        g = 256 if tm >= 256 else _SUBLANE
        tm = max(_SUBLANE, _round_down(tm, g))

    if num_tc >= 2 and m > _SUBLANE:
        # Two TensorCores: prefer an even number of grid steps so both cores
        # stay busy to the end (odd counts give one core an extra tile).
        steps = _cdiv(m, tm)
        if steps % 2 == 1:
            cand = min(m, _round_up(_cdiv(m, steps + 1), _SUBLANE))
            if cand <= cap and _cdiv(m, cand) % 2 == 0:
                tm = cand
    return tm


def prepare_mae_head_params(w1, b1, w2, b2, *, compute_dtype=jnp.bfloat16):
    """One-time parameter prep (transpose + bf16 cast + lane-pad d_out).

    w1: (decoder_embed_dim, embed_dim)            -- torch nn.Linear layout
    b1: (decoder_embed_dim,)
    w2: (patch_size*patch_size*out_chans, decoder_embed_dim)
    b2: (patch_size*patch_size*out_chans,)
    """
    d_h, d_in = w1.shape
    d_out, d_h2 = w2.shape
    assert d_h == d_h2, "weight shapes inconsistent"
    assert b1.shape == (d_h,) and b2.shape == (d_out,)

    w1_t = jnp.asarray(w1.T, dtype=compute_dtype)            # (d_in, d_h)
    w2_t = jnp.asarray(w2.T, dtype=compute_dtype)            # (d_h, d_out)
    b1_2d = jnp.asarray(b1, dtype=jnp.float32).reshape(1, d_h)
    b2_2d = jnp.asarray(b2, dtype=jnp.float32).reshape(1, d_out)

    # Lane-dense output: pad the output feature dim to a multiple of 128 so
    # stores are unmasked (sliced back off after the kernel).
    d_out_p = _round_up(d_out, _LANE)
    if d_out_p != d_out:
        w2_t = jnp.pad(w2_t, ((0, 0), (0, d_out_p - d_out)))
        b2_2d = jnp.pad(b2_2d, ((0, 0), (0, d_out_p - d_out)))

    return {"w1_t": w1_t, "b1": b1_2d, "w2_t": w2_t, "b2": b2_2d, "d_out": d_out}


def mae_prediction_head_apply(x, params):
    """MAEPredictionHead.forward using pre-prepared params.  x: (..., embed_dim)."""
    w1_t, b1_2d, w2_t, b2_2d = (params["w1_t"], params["b1"],
                                params["w2_t"], params["b2"])
    d_out = params["d_out"]
    *lead, d_in = x.shape
    d_in_w, d_h = w1_t.shape
    d_h_w, d_out_p = w2_t.shape
    assert d_in == d_in_w and d_h == d_h_w, "weight shapes inconsistent with x"

    m = int(math.prod(lead)) if lead else 1
    x2d = x.reshape(m, d_in)

    x_item = jnp.dtype(x.dtype).itemsize
    out_item = jnp.dtype(x.dtype).itemsize
    w_item = jnp.dtype(w1_t.dtype).itemsize

    vmem_budget, vmem_limit, num_tc, target = _tpu_sizing()
    tm = _pick_tile_rows(m, d_in, d_h, d_out_p, x_item, out_item, w_item,
                         vmem_budget=vmem_budget, num_tc=num_tc, target=target)
    grid = (_cdiv(m, tm),)    # partial last row-block handled by Pallas masking

    flops = 2 * m * (d_in * d_h + d_h * d_out_p)
    bytes_accessed = (m * d_in * x_item + m * d_out_p * out_item
                      + (d_in * d_h + d_h * d_out_p) * w_item
                      + 4 * (d_h + d_out_p))
    cost = pl.CostEstimate(flops=flops, transcendentals=m * d_h,
                           bytes_accessed=bytes_accessed)

    out2d = pl.pallas_call(
        _mae_head_kernel,
        out_shape=jax.ShapeDtypeStruct((m, d_out_p), x.dtype),
        grid_spec=pltpu.PrefetchScalarGridSpec(
            num_scalar_prefetch=0,
            grid=grid,
            in_specs=[
                pl.BlockSpec((tm, d_in), lambda i: (i, 0)),
                pl.BlockSpec((d_in, d_h), lambda i: (0, 0)),     # VMEM-resident
                pl.BlockSpec((1, d_h), lambda i: (0, 0)),
                pl.BlockSpec((d_h, d_out_p), lambda i: (0, 0)),  # VMEM-resident
                pl.BlockSpec((1, d_out_p), lambda i: (0, 0)),
            ],
            out_specs=pl.BlockSpec((tm, d_out_p), lambda i: (i, 0)),
        ),
        compiler_params=pltpu.CompilerParams(
            dimension_semantics=("parallel",),
            vmem_limit_bytes=vmem_limit,
        ),
        cost_estimate=cost,
    )(x2d, w1_t, b1_2d, w2_t, b2_2d)

    if d_out_p != d_out:
        out2d = out2d[:, :d_out]
    return out2d.reshape(*lead, d_out)


def mae_prediction_head(x, w1, b1, w2, b2):
    """One-shot convenience wrapper (prepares params every call).

    For repeated forward calls, call prepare_mae_head_params(...) once and
    reuse with mae_prediction_head_apply."""
    return mae_prediction_head_apply(x, prepare_mae_head_params(w1, b1, w2, b2))


if __name__ == "__main__":
    # Small, module-consistent shapes: batch=2, 64 tokens (8x8 patch grid),
    # embed_dim=128, decoder_embed_dim=256, patch_size=4, out_chans=8
    # -> target pixels per patch = 4*4*8 = 128 (lane-dense output).
    B, N = 2, 64
    embed_dim = 128
    decoder_embed_dim = 256
    patch_size, out_chans = 4, 8
    d_out = patch_size * patch_size * out_chans

    key = jax.random.PRNGKey(0)
    kx, kw1, kb1, kw2, kb2 = jax.random.split(key, 5)

    x = jax.random.normal(kx, (B, N, embed_dim), dtype=jnp.float32)
    # torch nn.Linear layout: weight (out_features, in_features)
    w1 = jax.random.normal(kw1, (decoder_embed_dim, embed_dim), jnp.float32) * 0.02
    b1 = jax.random.normal(kb1, (decoder_embed_dim,), jnp.float32) * 0.02
    w2 = jax.random.normal(kw2, (d_out, decoder_embed_dim), jnp.float32) * 0.02
    b2 = jax.random.normal(kb2, (d_out,), jnp.float32) * 0.02

    params = prepare_mae_head_params(w1, b1, w2, b2)   # one-time weight prep
    out = jax.block_until_ready(mae_prediction_head_apply(x, params))
    assert out.shape == (B, N, d_out), out.shape

    # Reference matching the kernel's bf16-MXU / f32-accumulate path.
    def _ref_bf16(x, w1, b1, w2, b2):
        xb = x.astype(jnp.bfloat16)
        h = jnp.dot(xb, w1.T.astype(jnp.bfloat16),
                    preferred_element_type=jnp.float32) + b1
        h = 0.5 * h * (1.0 + jax.scipy.special.erf(h * _INV_SQRT2))
        o = jnp.dot(h.astype(jnp.bfloat16), w2.T.astype(jnp.bfloat16),
                    preferred_element_type=jnp.float32) + b2
        return o.astype(x.dtype)

    # Exact f32 reference matching the PyTorch module.
    def _ref_f32(x, w1, b1, w2, b2):
        h = x @ w1.T + b1
        h = 0.5 * h * (1.0 + jax.scipy.special.erf(h * _INV_SQRT2))
        return h @ w2.T + b2

    err_bf16 = float(jnp.max(jnp.abs(out - _ref_bf16(x, w1, b1, w2, b2))))
    err_f32 = float(jnp.max(jnp.abs(out - _ref_f32(x, w1, b1, w2, b2))))
    assert err_bf16 < 5e-3, ("bf16-matched reference mismatch", err_bf16)
    assert err_f32 < 5e-2, ("f32 reference mismatch", err_f32)

    print("KERNEL_OK")
</pallas_src>

<mosaic_0001>
module attributes {stable_mosaic.version = 11 : i64} {
  func.func @_mae_head_kernel(%arg0: i32, %arg1: memref<64x128xf32, #tpu.memory_space<vmem>>, %arg2: memref<128x256xbf16, #tpu.memory_space<vmem>>, %arg3: memref<1x256xf32, #tpu.memory_space<vmem>>, %arg4: memref<256x128xbf16, #tpu.memory_space<vmem>>, %arg5: memref<1x128xf32, #tpu.memory_space<vmem>>, %arg6: memref<64x128xf32, #tpu.memory_space<vmem>>) attributes {dimension_semantics = [#tpu.dimension_semantics<parallel>], iteration_bounds = array<i64: 2>, scalar_prefetch = 0 : i64, scratch_operands = 0 : i64, tpu.core_type = #tpu.core_type<tc>, window_params = [{transform_indices = @transform_0, window_bounds = array<i64: 64, 128>}, {pipeline_mode = #tpu.pipeline_mode<synchronous>, transform_indices = @transform_1, window_bounds = array<i64: 128, 256>}, {pipeline_mode = #tpu.pipeline_mode<synchronous>, transform_indices = @transform_2, window_bounds = array<i64: 1, 256>}, {pipeline_mode = #tpu.pipeline_mode<synchronous>, transform_indices = @transform_3, window_bounds = array<i64: 256, 128>}, {pipeline_mode = #tpu.pipeline_mode<synchronous>, transform_indices = @transform_4, window_bounds = array<i64: 1, 128>}, {transform_indices = @transform_5, window_bounds = array<i64: 64, 128>}]} {
    %c0 = arith.constant 0 : index
    %c0_0 = arith.constant 0 : index
    %0 = vector.load %arg1[%c0, %c0_0] : memref<64x128xf32, #tpu.memory_space<vmem>>, vector<64x128xf32>
    %1 = arith.truncf %0 : vector<64x128xf32> to vector<64x128xbf16>
    %c0_1 = arith.constant 0 : index
    %c0_2 = arith.constant 0 : index
    %2 = vector.load %arg2[%c0_1, %c0_2] : memref<128x256xbf16, #tpu.memory_space<vmem>>, vector<128x256xbf16>
    %cst = arith.constant dense<0.000000e+00> : vector<64x256xf32>
    %3 = tpu.matmul %1, %2, %cst {dimension_numbers = #tpu.dot_dimension_numbers<[1], [0], [0], [1], [0, 0, 1, 1], [], []>} : vector<64x128xbf16>, vector<128x256xbf16>, vector<64x256xf32> -> vector<64x256xf32>
    %c0_3 = arith.constant 0 : index
    %c0_4 = arith.constant 0 : index
    %4 = vector.load %arg3[%c0_3, %c0_4] : memref<1x256xf32, #tpu.memory_space<vmem>>, vector<1x256xf32>
    %5 = vector.broadcast %4 : vector<1x256xf32> to vector<64x256xf32>
    %6 = arith.addf %3, %5 : vector<64x256xf32>
    %cst_5 = arith.constant 5.000000e-01 : f32
    %7 = vector.broadcast %cst_5 : f32 to vector<64x256xf32>
    %8 = arith.mulf %7, %6 : vector<64x256xf32>
    %cst_6 = arith.constant 0.707106769 : f32
    %9 = vector.broadcast %cst_6 : f32 to vector<64x256xf32>
    %10 = arith.mulf %6, %9 : vector<64x256xf32>
    %cst_7 = arith.constant 0.000000e+00 : f32
    %11 = vector.broadcast %cst_7 : f32 to vector<64x256xf32>
    %12 = arith.cmpf olt, %10, %11 : vector<64x256xf32>
    %cst_8 = arith.constant -1.000000e+00 : f32
    %cst_9 = arith.constant 1.000000e+00 : f32
    %13 = vector.broadcast %cst_8 : f32 to vector<64x256xf32>
    %14 = vector.broadcast %cst_9 : f32 to vector<64x256xf32>
    %15 = arith.select %12, %13, %14 : vector<64x256xi1>, vector<64x256xf32>
    %16 = math.absf %10 : vector<64x256xf32>
    %cst_10 = arith.constant 0.327591091 : f32
    %17 = vector.broadcast %cst_10 : f32 to vector<64x256xf32>
    %18 = arith.mulf %17, %16 : vector<64x256xf32>
    %cst_11 = arith.constant 1.000000e+00 : f32
    %19 = vector.broadcast %cst_11 : f32 to vector<64x256xf32>
    %20 = arith.addf %19, %18 : vector<64x256xf32>
    %cst_12 = arith.constant 1.000000e+00 : f32
    %21 = vector.broadcast %cst_12 : f32 to vector<64x256xf32>
    %22 = arith.divf %21, %20 : vector<64x256xf32>
    %cst_13 = arith.constant 1.06140542 : f32
    %23 = vector.broadcast %cst_13 : f32 to vector<64x256xf32>
    %24 = arith.mulf %23, %22 : vector<64x256xf32>
    %cst_14 = arith.constant -1.45315206 : f32
    %25 = vector.broadcast %cst_14 : f32 to vector<64x256xf32>
    %26 = arith.addf %24, %25 : vector<64x256xf32>
    %27 = arith.mulf %26, %22 : vector<64x256xf32>
    %cst_15 = arith.constant 1.42141378 : f32
    %28 = vector.broadcast %cst_15 : f32 to vector<64x256xf32>
    %29 = arith.addf %27, %28 : vector<64x256xf32>
    %30 = arith.mulf %29, %22 : vector<64x256xf32>
    %cst_16 = arith.constant -0.284496725 : f32
    %31 = vector.broadcast %cst_16 : f32 to vector<64x256xf32>
    %32 = arith.addf %30, %31 : vector<64x256xf32>
    %33 = arith.mulf %32, %22 : vector<64x256xf32>
    %cst_17 = arith.constant 0.254829586 : f32
    %34 = vector.broadcast %cst_17 : f32 to vector<64x256xf32>
    %35 = arith.addf %33, %34 : vector<64x256xf32>
    %36 = arith.mulf %35, %22 : vector<64x256xf32>
    %cst_18 = arith.constant 0.000000e+00 : f32
    %37 = vector.broadcast %cst_18 : f32 to vector<64x256xf32>
    %38 = arith.subf %37, %16 : vector<64x256xf32>
    %39 = arith.mulf %38, %16 : vector<64x256xf32>
    %40 = math.exp %39 : vector<64x256xf32>
    %41 = arith.mulf %36, %40 : vector<64x256xf32>
    %cst_19 = arith.constant 1.000000e+00 : f32
    %42 = vector.broadcast %cst_19 : f32 to vector<64x256xf32>
    %43 = arith.subf %42, %41 : vector<64x256xf32>
    %44 = arith.mulf %15, %43 : vector<64x256xf32>
    %cst_20 = arith.constant 1.000000e+00 : f32
    %45 = vector.broadcast %cst_20 : f32 to vector<64x256xf32>
    %46 = arith.addf %45, %44 : vector<64x256xf32>
    %47 = arith.mulf %8, %46 : vector<64x256xf32>
    %48 = arith.truncf %47 : vector<64x256xf32> to vector<64x256xbf16>
    %c0_21 = arith.constant 0 : index
    %c0_22 = arith.constant 0 : index
    %49 = vector.load %arg4[%c0_21, %c0_22] : memref<256x128xbf16, #tpu.memory_space<vmem>>, vector<256x128xbf16>
    %cst_23 = arith.constant dense<0.000000e+00> : vector<64x128xf32>
    %50 = tpu.matmul %48, %49, %cst_23 {dimension_numbers = #tpu.dot_dimension_numbers<[1], [0], [0], [1], [0, 0, 1, 1], [], []>} : vector<64x256xbf16>, vector<256x128xbf16>, vector<64x128xf32> -> vector<64x128xf32>
    %c0_24 = arith.constant 0 : index
    %c0_25 = arith.constant 0 : index
    %51 = vector.load %arg5[%c0_24, %c0_25] : memref<1x128xf32, #tpu.memory_space<vmem>>, vector<1x128xf32>
    %52 = vector.broadcast %51 : vector<1x128xf32> to vector<64x128xf32>
    %53 = arith.addf %50, %52 : vector<64x128xf32>
    %c0_26 = arith.constant 0 : index
    %c0_27 = arith.constant 0 : index
    %54 = vector.load %arg6[%c0_26, %c0_27] : memref<64x128xf32, #tpu.memory_space<vmem>>, vector<64x128xf32>
    tpu.vector_store %arg6[%c0_26, %c0_27], %53 {strides = array<i32>} : memref<64x128xf32, #tpu.memory_space<vmem>>, vector<64x128xf32>,
    return
  }
  func.func @transform_0(%arg0: i32) -> (i32, i32) {
    %c0_i32 = arith.constant 0 : i32
    %c0_i32_0 = arith.constant 0 : i32
    return %arg0, %c0_i32 : i32, i32
  }
  func.func @transform_1(%arg0: i32) -> (i32, i32) {
    %c0_i32 = arith.constant 0 : i32
    %c0_i32_0 = arith.constant 0 : i32
    %c0_i32_1 = arith.constant 0 : i32
    return %c0_i32, %c0_i32_0 : i32, i32
  }
  func.func @transform_2(%arg0: i32) -> (i32, i32) {
    %c0_i32 = arith.constant 0 : i32
    %c0_i32_0 = arith.constant 0 : i32
    %c0_i32_1 = arith.constant 0 : i32
    return %c0_i32, %c0_i32_0 : i32, i32
  }
  func.func @transform_3(%arg0: i32) -> (i32, i32) {
    %c0_i32 = arith.constant 0 : i32
    %c0_i32_0 = arith.constant 0 : i32
    %c0_i32_1 = arith.constant 0 : i32
    return %c0_i32, %c0_i32_0 : i32, i32
  }
  func.func @transform_4(%arg0: i32) -> (i32, i32) {
    %c0_i32 = arith.constant 0 : i32
    %c0_i32_0 = arith.constant 0 : i32
    %c0_i32_1 = arith.constant 0 : i32
    return %c0_i32, %c0_i32_0 : i32, i32
  }
  func.func @transform_5(%arg0: i32) -> (i32, i32) {
    %c0_i32 = arith.constant 0 : i32
    %c0_i32_0 = arith.constant 0 : i32
    return %arg0, %c0_i32 : i32, i32
  }
}

</mosaic_0001>

<llo_original>
// kernel: tpu_custom_call.1
$region0: #{tpu_custom_call.1}
  #allocation0 [shape = 'u32[]', space=smem, size = 0x4, offset = 0x4, fixed_abs, tag = 'smem constant byte address 0x4 - core index']
  #allocation1 [shape = 'u32[72,128]{1,0:T(1,128)}', space=vmem, size = 0x9000, scoped, tag = 'internal scratch']
  %s0 = inlined_call_operand.hbm [shape: f32[128,128], index: 0, kind: input, shape index: {}]
  %s1 = inlined_call_operand.hbm [shape: bf16[128,256], index: 1, kind: input, shape index: {}]
  %s2 = inlined_call_operand.hbm [shape: f32[1,256], index: 2, kind: input, shape index: {}]
  %s3 = inlined_call_operand.hbm [shape: bf16[256,128], index: 3, kind: input, shape index: {}]
  %s4 = inlined_call_operand.vmem [shape: f32[1,128], index: 4, kind: input, shape index: {}]
  %s5 = inlined_call_operand.hbm [shape: f32[128,128], index: 5, kind: output, shape index: {}]
  %s6 = sld [smem:[#allocation0]]
  $region69: #{tpu_custom_call.1} parent=0
    _
  %s8 = ssub.s32 1, %s6
  %s9 = scalar_select 0, %s8, %s6
  $region1: #{tpu_custom_call.1} parent=0
    #allocation2 [shape = 'u8[65536]{0}', space=vmem, size = 0x10000, scoped, tag = 'input window, operand 0']
    #allocation3 [shape = 's32[2]{0}', space=sflag, size = 0x8, scoped, tag = 'scoped memory for tpu_custom_call.1']
    #allocation4 [shape = 's32[2]{0}', space=sflag, size = 0x8, scoped, tag = 'scoped memory for tpu_custom_call.1']
    #allocation5 [shape = 'u8[65536]{0}', space=vmem, size = 0x10000, scoped, tag = 'input window, operand 1, single buffered']
    #allocation6 [shape = 's32[1]{0}', space=sflag, size = 0x4, scoped, tag = 'scoped memory for tpu_custom_call.1']
    #allocation7 [shape = 'u8[1024]{0}', space=vmem, size = 0x400, scoped, tag = 'input window, operand 2, single buffered']
    #allocation8 [shape = 'u8[65536]{0}', space=vmem, size = 0x10000, scoped, tag = 'input window, operand 3, single buffered']
    #allocation9 [shape = 's32[1]{0}', space=sflag, size = 0x4, scoped, tag = 'scoped memory for tpu_custom_call.1']
    #allocation10 [shape = 'u8[65536]{0}', space=vmem, size = 0x10000, scoped, tag = 'output window, operand 0']
    %10 = vsyncpa [#allocation3], 0
    %s11 = scalar_lea.sflag [#allocation3], 1
    %12 = vsyncpa %s11, 0
    %13 = vsyncpa [#allocation6], 0
    %14 = vsyncpa [#allocation9], 0
    %15 = vsyncpa [#allocation4], 0
    %s16 = scalar_lea.sflag [#allocation4], 1
    %17 = vsyncpa %s16, 0
    loop: start=0, step=1, limit=4
    $region2: #{tpu_custom_call.1} parent=1 // loop_pre_header
      _
    $region3: #{tpu_custom_call.1} parent=1 // loop_header
      %s19 = sphi 0, %s23
      %p20 = scmp.ge.s32.totalorder %s19, 4
      %s29 = sphi 0, %s31
      %s32 = sphi 0, %s29
      %s33 = sphi 0, %s32
      %s49 = sphi 0, %s33
      %s53 = sphi 0, %s53
      %s55 = sphi 0, %s53
      %s56 = sphi 0, %s55
      %s70 = sphi 0, %s56
      %s74 = sphi 0, %s74
      %s76 = sphi 0, %s74
      %s77 = sphi 0, %s76
      %s91 = sphi 0, %s77
      %s95 = sphi 0, %s95
      %s97 = sphi 0, %s95
      %s98 = sphi 0, %s97
      %s112 = sphi 0, %s98
      %s116 = sphi 0, %s116
      %s118 = sphi 0, %s116
      %s119 = sphi 0, %s118
      %s133 = sphi 0, %s119
      %s139 = sphi 0, %s141
      %s142 = sphi 0, %s139
      %s143 = sphi 0, %s142
      %s159 = sphi 0, %s143
    $region4: #{tpu_custom_call.1} parent=1 // loop_header_branch
      %22 = sbr.rel (%p20) target = $region8
    $region5: #{tpu_custom_call.1} parent=1 // loop_body
      %s24 = ssub.s32 %s19, 1
      %s25 = ssub.s32 %s19, 2
      %s26 = sadd.s32 %s19, 1
      %s27 = ssub.s32 %s19, %s26
      %p28 = scmp.eq.s32.totalorder %s27, 0
      %s30 = sadd.s32 %s29, 1
      %s31 = scalar_select %p28, %s29, %s30
      %p34 = pneg %p28
      %p35 = scmp.eq.s32.totalorder %s19, 1
      %p36 = por %p34, %p35
      %p37 = scmp.ne.s32.totalorder %s29, %s32
      %p38 = scmp.eq.s32.totalorder %s19, 0
      %p39 = por %p37, %p38
      %p40 = scmp.ne.s32.totalorder %s29, %s32
      %p41 = scmp.eq.s32.totalorder %s24, 1
      %p42 = por %p40, %p41
      %p43 = scmp.ne.s32.totalorder %s32, %s33
      %p44 = scmp.eq.s32.totalorder %s24, 0
      %p45 = por %p43, %p44
      %p46 = scmp.ne.s32.totalorder %s32, %s33
      %p47 = scmp.eq.s32.totalorder %s25, 1
      %p48 = por %p46, %p47
      %p50 = scmp.ne.s32.totalorder %s33, %s49
      %p51 = scmp.eq.s32.totalorder %s25, 0
      %p52 = por %p50, %p51
      %s54 = sadd.s32 %s53, 1
      %p57 = scmp.eq.s32.totalorder %s19, 1
      %p58 = scmp.ne.s32.totalorder %s53, %s55
      %p59 = scmp.eq.s32.totalorder %s19, 0
      %p60 = por %p58, %p59
      %p61 = scmp.ne.s32.totalorder %s53, %s55
      %p62 = scmp.eq.s32.totalorder %s24, 1
      %p63 = por %p61, %p62
      %p64 = scmp.ne.s32.totalorder %s55, %s56
      %p65 = scmp.eq.s32.totalorder %s24, 0
      %p66 = por %p64, %p65
      %p67 = scmp.ne.s32.totalorder %s55, %s56
      %p68 = scmp.eq.s32.totalorder %s25, 1
      %p69 = por %p67, %p68
      %p71 = scmp.ne.s32.totalorder %s56, %s70
      %p72 = scmp.eq.s32.totalorder %s25, 0
      %p73 = por %p71, %p72
      %s75 = sadd.s32 %s74, 1
      %p78 = scmp.eq.s32.totalorder %s19, 1
      %p79 = scmp.ne.s32.totalorder %s74, %s76
      %p80 = scmp.eq.s32.totalorder %s19, 0
      %p81 = por %p79, %p80
      %p82 = scmp.ne.s32.totalorder %s74, %s76
      %p83 = scmp.eq.s32.totalorder %s24, 1
      %p84 = por %p82, %p83
      %p85 = scmp.ne.s32.totalorder %s76, %s77
      %p86 = scmp.eq.s32.totalorder %s24, 0
      %p87 = por %p85, %p86
      %p88 = scmp.ne.s32.totalorder %s76, %s77
      %p89 = scmp.eq.s32.totalorder %s25, 1
      %p90 = por %p88, %p89
      %p92 = scmp.ne.s32.totalorder %s77, %s91
      %p93 = scmp.eq.s32.totalorder %s25, 0
      %p94 = por %p92, %p93
      %s96 = sadd.s32 %s95, 1
      %p99 = scmp.eq.s32.totalorder %s19, 1
      %p100 = scmp.ne.s32.totalorder %s95, %s97
      %p101 = scmp.eq.s32.totalorder %s19, 0
      %p102 = por %p100, %p101
      %p103 = scmp.ne.s32.totalorder %s95, %s97
      %p104 = scmp.eq.s32.totalorder %s24, 1
      %p105 = por %p103, %p104
      %p106 = scmp.ne.s32.totalorder %s97, %s98
      %p107 = scmp.eq.s32.totalorder %s24, 0
      %p108 = por %p106, %p107
      %p109 = scmp.ne.s32.totalorder %s97, %s98
      %p110 = scmp.eq.s32.totalorder %s25, 1
      %p111 = por %p109, %p110
      %p113 = scmp.ne.s32.totalorder %s98, %s112
      %p114 = scmp.eq.s32.totalorder %s25, 0
      %p115 = por %p113, %p114
      %s117 = sadd.s32 %s116, 1
      %p120 = scmp.eq.s32.totalorder %s19, 1
      %p121 = scmp.ne.s32.totalorder %s116, %s118
      %p122 = scmp.eq.s32.totalorder %s19, 0
      %p123 = por %p121, %p122
      %p124 = scmp.ne.s32.totalorder %s116, %s118
      %p125 = scmp.eq.s32.totalorder %s24, 1
      %p126 = por %p124, %p125
      %p127 = scmp.ne.s32.totalorder %s118, %s119
      %p128 = scmp.eq.s32.totalorder %s24, 0
      %p129 = por %p127, %p128
      %p130 = scmp.ne.s32.totalorder %s118, %s119
      %p131 = scmp.eq.s32.totalorder %s25, 1
      %p132 = por %p130, %p131
      %p134 = scmp.ne.s32.totalorder %s119, %s133
      %p135 = scmp.eq.s32.totalorder %s25, 0
      %p136 = por %p134, %p135
      %s137 = ssub.s32 %s19, %s26
      %p138 = scmp.eq.s32.totalorder %s137, 0
      %s140 = sadd.s32 %s139, 1
      %s141 = scalar_select %p138, %s139, %s140
      %p144 = pneg %p138
      %p145 = scmp.eq.s32.totalorder %s19, 1
      %p146 = por %p144, %p145
      %p147 = scmp.ne.s32.totalorder %s139, %s142
      %p148 = scmp.eq.s32.totalorder %s19, 0
      %p149 = por %p147, %p148
      %p150 = scmp.ne.s32.totalorder %s139, %s142
      %p151 = scmp.eq.s32.totalorder %s24, 1
      %p152 = por %p150, %p151
      %p153 = scmp.ne.s32.totalorder %s142, %s143
      %p154 = scmp.eq.s32.totalorder %s24, 0
      %p155 = por %p153, %p154
      %p156 = scmp.ne.s32.totalorder %s142, %s143
      %p157 = scmp.eq.s32.totalorder %s25, 1
      %p158 = por %p156, %p157
      %p160 = scmp.ne.s32.totalorder %s143, %s159
      %p161 = scmp.eq.s32.totalorder %s25, 0
      %p162 = por %p160, %p161
      %p163 = scmp.le.s32.totalorder 1, %s19
      %p164 = scmp.lt.s32.totalorder %s19, 3
      %p165 = pnand %p163, %p164
      %p166 = pneg %p165
      // Predicated region
      $region9: #{tpu_custom_call.1} parent=5 // pred_check
        _
      $region10: #{tpu_custom_call.1} parent=5 // pred_check_branch
        %168 = sbr.rel (%p165) target = $region12
      $region11: #{tpu_custom_call.1} parent=5 // pred_region
        %s169 = ssub.s32 %s19, 1
        // Predicated region
        $region13: #{tpu_custom_call.1} parent=11 // pred_check
          %p170 = pneg %p66
        $region14: #{tpu_custom_call.1} parent=11 // pred_check_branch
          %172 = sbr.rel (%p170) target = $region16
        $region15: #{tpu_custom_call.1} parent=11 // pred_region
          %174 = vsyncadd [#allocation6], 0
          %s175 = sshll.u32 %s1, 4
          %s176 = int_to_ptr.hbm [resolvable:$true] %s175
          %s177 = sshll.u32 [#allocation5], 4
          %s178 = int_to_ptr.vmem [resolvable:$true] %s177
          %183 = dma.hbm_to_vmem [thread:$0]  %s176, 2048, %s178, [#allocation6], 128, 128, 8
        $region16: #{tpu_custom_call.1} parent=11 // pred_fallthru
          _
        // Predicated region
        $region17: #{tpu_custom_call.1} parent=11 // pred_check
          %p184 = pneg %p87
        $region18: #{tpu_custom_call.1} parent=11 // pred_check_branch
          %186 = sbr.rel (%p184) target = $region20
        $region19: #{tpu_custom_call.1} parent=11 // pred_region
          %188 = vsyncadd [#allocation6], 0
          %s190 = sshll.u32 %s2, 4
          %s191 = int_to_ptr.hbm [resolvable:$true] %s190
          %s192 = sshll.u32 [#allocation7], 4
          %s193 = int_to_ptr.vmem [resolvable:$true] %s192
          %195 = dma.hbm_to_vmem [thread:$0]  %s191, 32, %s193, [#allocation6]
        $region20: #{tpu_custom_call.1} parent=11 // pred_fallthru
          _
        // Predicated region
        $region21: #{tpu_custom_call.1} parent=11 // pred_check
          %p196 = pneg %p108
        $region22: #{tpu_custom_call.1} parent=11 // pred_check_branch
          %198 = sbr.rel (%p196) target = $region24
        $region23: #{tpu_custom_call.1} parent=11 // pred_region
          %200 = vsyncadd [#allocation9], 0
          %s201 = sshll.u32 %s3, 4
          %s202 = int_to_ptr.hbm [resolvable:$true] %s201
          %s203 = sshll.u32 [#allocation8], 4
          %s204 = int_to_ptr.vmem [resolvable:$true] %s203
          %209 = dma.hbm_to_vmem [thread:$0]  %s202, 2048, %s204, [#allocation9], 64, 64, 4
        $region24: #{tpu_custom_call.1} parent=11 // pred_fallthru
          _
        // Predicated region
        $region25: #{tpu_custom_call.1} parent=11 // pred_check
          %p210 = pneg %p129
        $region26: #{tpu_custom_call.1} parent=11 // pred_check_branch
          %212 = sbr.rel (%p210) target = $region28
        $region27: #{tpu_custom_call.1} parent=11 // pred_region
          _
        $region28: #{tpu_custom_call.1} parent=11 // pred_fallthru
          _
      $region12: #{tpu_custom_call.1} parent=5 // pred_fallthru
        _
      %p213 = scmp.lt.s32.totalorder %s19, 2
      // Predicated region
      $region29: #{tpu_custom_call.1} parent=5 // pred_check
        %p214 = pneg %p213
      $region30: #{tpu_custom_call.1} parent=5 // pred_check_branch
        %216 = sbr.rel (%p214) target = $region32
      $region31: #{tpu_custom_call.1} parent=5 // pred_region
        // Predicated region
        $region33: #{tpu_custom_call.1} parent=31 // pred_check
          %p217 = pneg %p39
        $region34: #{tpu_custom_call.1} parent=31 // pred_check_branch
          %219 = sbr.rel (%p217) target = $region36
        $region35: #{tpu_custom_call.1} parent=31 // pred_region
          %s220 = sand.u32 %s29, 1
          %s221 = scalar_lea.sflag [#allocation3], %s220
          %s222 = sand.u32 %s29, 1
          %s223 = smul.addr %s222, 64
          %s224 = scalar_lea.vmem [#allocation2], %s223
          %s225 = smul.u32 8, %s19
          %227 = vsyncadd %s221, 0
          %s228 = smul.addr %s225, 8
          %s229 = scalar_lea.hbm %s0, %s228
          %s230 = sshll.u32 %s229, 4
          %s231 = int_to_ptr.hbm [resolvable:$true] %s230
          %s232 = sshll.u32 %s224, 4
          %s233 = int_to_ptr.vmem [resolvable:$true] %s232
          %238 = dma.hbm_to_vmem [thread:$0]  %s231, 1024, %s233, %s221, 128, 128, 8
        $region36: #{tpu_custom_call.1} parent=31 // pred_fallthru
          _
      $region32: #{tpu_custom_call.1} parent=5 // pred_fallthru
        _
      %p239 = scmp.le.s32.totalorder 1, %s19
      %p240 = scmp.lt.s32.totalorder %s19, 3
      %p241 = pnand %p239, %p240
      %p242 = pneg %p241
      // Predicated region
      $region37: #{tpu_custom_call.1} parent=5 // pred_check
        _
      $region38: #{tpu_custom_call.1} parent=5 // pred_check_branch
        %244 = sbr.rel (%p241) target = $region40
      $region39: #{tpu_custom_call.1} parent=5 // pred_region
        %s245 = ssub.s32 %s19, 1
        %s246 = sand.u32 %s32, 1
        %s247 = scalar_lea.sflag [#allocation3], %s246
        %s248 = sand.u32 %s32, 1
        %s249 = smul.addr %s248, 64
        %s250 = scalar_lea.vmem [#allocation2], %s249
        // Predicated region
        $region41: #{tpu_custom_call.1} parent=39 // pred_check
          %p251 = pneg %p45
        $region42: #{tpu_custom_call.1} parent=39 // pred_check_branch
          %253 = sbr.rel (%p251) target = $region44
        $region43: #{tpu_custom_call.1} parent=39 // pred_region
          %255 = dma.done %s247, 1024
        $region44: #{tpu_custom_call.1} parent=39 // pred_fallthru
          _
        // Predicated region
        $region45: #{tpu_custom_call.1} parent=39 // pred_check
          %p256 = pneg %p66
        $region46: #{tpu_custom_call.1} parent=39 // pred_check_branch
          %258 = sbr.rel (%p256) target = $region48
        $region47: #{tpu_custom_call.1} parent=39 // pred_region
          %260 = dma.done [#allocation6], 2048
        $region48: #{tpu_custom_call.1} parent=39 // pred_fallthru
          _
        // Predicated region
        $region49: #{tpu_custom_call.1} parent=39 // pred_check
          %p261 = pneg %p87
        $region50: #{tpu_custom_call.1} parent=39 // pred_check_branch
          %263 = sbr.rel (%p261) target = $region52
        $region51: #{tpu_custom_call.1} parent=39 // pred_region
          %265 = dma.done [#allocation6], 32
        $region52: #{tpu_custom_call.1} parent=39 // pred_fallthru
          _
        // Predicated region
        $region53: #{tpu_custom_call.1} parent=39 // pred_check
          %p266 = pneg %p108
        $region54: #{tpu_custom_call.1} parent=39 // pred_check_branch
          %268 = sbr.rel (%p266) target = $region56
        $region55: #{tpu_custom_call.1} parent=39 // pred_region
          %270 = dma.done [#allocation9], 2048
        $region56: #{tpu_custom_call.1} parent=39 // pred_fallthru
          _
        %s271 = sand.u32 %s32, 1
        %s272 = scalar_lea.sflag [#allocation3], %s271
        %s273 = sand.u32 %s32, 1
        %s274 = smul.addr %s273, 64
        %s275 = scalar_lea.vmem [#allocation2], %s274
        %p276 = pneg %p45
        %p277 = pneg %p42
        %p278 = pneg %p66
        %p279 = pneg %p63
        %p280 = pneg %p87
        %p281 = pneg %p84
        %p282 = pneg %p108
        %p283 = pneg %p105
        %p284 = pneg %p129
        %p285 = pneg %p126
        %p286 = pneg %p155
        %p287 = pneg %p152
        %s288 = sand.u32 %s142, 1
        %s289 = scalar_lea.sflag [#allocation4], %s288
        %s290 = sand.u32 %s142, 1
        %s291 = smul.addr %s290, 64
        %s292 = scalar_lea.vmem [#allocation10], %s291
        %s293 = smul.u32 8, %s24
        %s294 = smul.u32 8, %s24
        %v295 = vld [vmem:[%s250] sm:$0xff]
        %v296 = vld [vmem:[%s250 + $0x8] sm:$0xff]
        %v297 = vld [vmem:[%s250 + $0x10] sm:$0xff]
        %v298 = vld [vmem:[%s250 + $0x18] sm:$0xff]
        %v299 = vld [vmem:[%s250 + $0x20] sm:$0xff]
        %v300 = vld [vmem:[%s250 + $0x28] sm:$0xff]
        %v301 = vld [vmem:[%s250 + $0x30] sm:$0xff]
        %v302 = vld [vmem:[%s250 + $0x38] sm:$0xff]
        %v303 = vpack.c.bf16 %v296, %v295
        %v304 = vpack.c.bf16 %v298, %v297
        %v305 = vpack.c.bf16 %v300, %v299
        %v306 = vpack.c.bf16 %v302, %v301
        %v307 = vld [vmem:[#allocation5] sm:$0xff]
        %v308 = vld [vmem:[#allocation5 + $0x8] sm:$0xff]
        %v309 = vld [vmem:[#allocation5 + $0x10] sm:$0xff]
        %v310 = vld [vmem:[#allocation5 + $0x18] sm:$0xff]
        %v311 = vld [vmem:[#allocation5 + $0x20] sm:$0xff]
        %v312 = vld [vmem:[#allocation5 + $0x28] sm:$0xff]
        %v313 = vld [vmem:[#allocation5 + $0x30] sm:$0xff]
        %v314 = vld [vmem:[#allocation5 + $0x38] sm:$0xff]
        %v315 = vld [vmem:[#allocation5 + $0x40] sm:$0xff]
        %v316 = vld [vmem:[#allocation5 + $0x48] sm:$0xff]
        %v317 = vld [vmem:[#allocation5 + $0x50] sm:$0xff]
        %v318 = vld [vmem:[#allocation5 + $0x58] sm:$0xff]
        %v319 = vld [vmem:[#allocation5 + $0x60] sm:$0xff]
        %v320 = vld [vmem:[#allocation5 + $0x68] sm:$0xff]
        %v321 = vld [vmem:[#allocation5 + $0x70] sm:$0xff]
        %v322 = vld [vmem:[#allocation5 + $0x78] sm:$0xff]
        %v323 = vld [vmem:[#allocation7] sm:$0x3]
        %v325 = vperm.slane %v323, 0
        %v326 = vperm.slane %v323, 1
        %v345 = vunpack.c.l.b16 %v307
        %v346 = vunpack.c.h.b16 %v307
        %v347 = vunpack.c.l.b16 %v308
        %v348 = vunpack.c.h.b16 %v308
        %v349 = vunpack.c.l.b16 %v309
        %v350 = vunpack.c.h.b16 %v309
        %v351 = vunpack.c.l.b16 %v310
        %v352 = vunpack.c.h.b16 %v310
        %v353 = vunpack.c.l.b16 %v311
        %v354 = vunpack.c.h.b16 %v311
        %v355 = vunpack.c.l.b16 %v312
        %v356 = vunpack.c.h.b16 %v312
        %v357 = vunpack.c.l.b16 %v313
        %v358 = vunpack.c.h.b16 %v313
        %v359 = vunpack.c.l.b16 %v314
        %v360 = vunpack.c.h.b16 %v314
        %v361 = vunpack.c.l.b16 %v315
        %v362 = vunpack.c.h.b16 %v315
        %v363 = vunpack.c.l.b16 %v316
        %v364 = vunpack.c.h.b16 %v316
        %v365 = vunpack.c.l.b16 %v317
        %v366 = vunpack.c.h.b16 %v317
        %v367 = vunpack.c.l.b16 %v318
        %v368 = vunpack.c.h.b16 %v318
        %v369 = vunpack.c.l.b16 %v319
        %v370 = vunpack.c.h.b16 %v319
        %v371 = vunpack.c.l.b16 %v320
        %v372 = vunpack.c.h.b16 %v320
        %v373 = vunpack.c.l.b16 %v321
        %v374 = vunpack.c.h.b16 %v321
        %v375 = vunpack.c.l.b16 %v322
        %v376 = vunpack.c.h.b16 %v322
        %v377 = vpack.c.b16 %v347, %v345
        %v378 = vpack.c.b16 %v348, %v346
        %v379 = vpack.c.b16 %v351, %v349
        %v380 = vpack.c.b16 %v352, %v350
        %v381 = vpack.c.b16 %v355, %v353
        %v382 = vpack.c.b16 %v356, %v354
        %v383 = vpack.c.b16 %v359, %v357
        %v384 = vpack.c.b16 %v360, %v358
        %v385 = vpack.c.b16 %v363, %v361
        %v386 = vpack.c.b16 %v364, %v362
        %v387 = vpack.c.b16 %v367, %v365
        %v388 = vpack.c.b16 %v368, %v366
        %v389 = vpack.c.b16 %v371, %v369
        %v390 = vpack.c.b16 %v372, %v370
        %v391 = vpack.c.b16 %v375, %v373
        %v392 = vpack.c.b16 %v376, %v374
        %409 = vmatpush.bf16.msra.mxu0 %v391
        %410 = vmatpush.bf16.msra.mxu0 %v389
        %411 = vmatpush.bf16.msra.mxu0 %v387
        %412 = vmatpush.bf16.msra.mxu0 %v385
        %413 = vmatpush.bf16.msra.mxu0 %v383
        %414 = vmatpush.bf16.msra.mxu0 %v381
        %415 = vmatpush.bf16.msra.mxu0 %v379
        %416 = vmatpush.bf16.msra.mxu0 %v377
        %417 = vmatmul.bf16.gmra.mxu0 %v303
        %v418 = vpop.f32.mrf.mxu0
        %v419 = vadd.f32 %v325, %v418
        %v420 = vpop.f32.mrf.mxu0
        %v421 = vadd.f32 %v325, %v420
        %422 = vmatmul.bf16.gmra.mxu0 %v304
        %v423 = vpop.f32.mrf.mxu0
        %v424 = vadd.f32 %v325, %v423
        %v425 = vpop.f32.mrf.mxu0
        %v426 = vadd.f32 %v325, %v425
        %427 = vmatmul.bf16.gmra.mxu0 %v305
        %v428 = vpop.f32.mrf.mxu0
        %v429 = vadd.f32 %v325, %v428
        %v430 = vpop.f32.mrf.mxu0
        %v431 = vadd.f32 %v325, %v430
        %432 = vmatmul.bf16.gmra.mxu0 %v306
        %v433 = vpop.f32.mrf.mxu0
        %v434 = vadd.f32 %v325, %v433
        %v435 = vpop.f32.mrf.mxu0
        %v436 = vadd.f32 %v325, %v435
        %437 = vdwg.mxu0
        %438 = vmatpush.bf16.msra.mxu0 %v392
        %439 = vmatpush.bf16.msra.mxu0 %v390
        %440 = vmatpush.bf16.msra.mxu0 %v388
        %441 = vmatpush.bf16.msra.mxu0 %v386
        %442 = vmatpush.bf16.msra.mxu0 %v384
        %443 = vmatpush.bf16.msra.mxu0 %v382
        %444 = vmatpush.bf16.msra.mxu0 %v380
        %445 = vmatpush.bf16.msra.mxu0 %v378
        %446 = vmatmul.bf16.gmra.mxu0 %v303
        %v447 = vpop.f32.mrf.mxu0
        %v448 = vadd.f32 %v326, %v447
        %v449 = vpop.f32.mrf.mxu0
        %v450 = vadd.f32 %v326, %v449
        %451 = vmatmul.bf16.gmra.mxu0 %v304
        %v452 = vpop.f32.mrf.mxu0
        %v453 = vadd.f32 %v326, %v452
        %v454 = vpop.f32.mrf.mxu0
        %v455 = vadd.f32 %v326, %v454
        %456 = vmatmul.bf16.gmra.mxu0 %v305
        %v457 = vpop.f32.mrf.mxu0
        %v458 = vadd.f32 %v326, %v457
        %v459 = vpop.f32.mrf.mxu0
        %v460 = vadd.f32 %v326, %v459
        %461 = vmatmul.bf16.gmra.mxu0 %v306
        %v462 = vpop.f32.mrf.mxu0
        %v463 = vadd.f32 %v326, %v462
        %v464 = vpop.f32.mrf.mxu0
        %v465 = vadd.f32 %v326, %v464
        %466 = vdwg.mxu0
        %v467 = vmul.f32 %v419, 0.5
        %v468 = vmul.f32 %v448, 0.5
        %v469 = vmul.f32 %v421, 0.5
        %v470 = vmul.f32 %v450, 0.5
        %v471 = vmul.f32 %v424, 0.5
        %v472 = vmul.f32 %v453, 0.5
        %v473 = vmul.f32 %v426, 0.5
        %v474 = vmul.f32 %v455, 0.5
        %v475 = vmul.f32 %v429, 0.5
        %v476 = vmul.f32 %v458, 0.5
        %v477 = vmul.f32 %v431, 0.5
        %v478 = vmul.f32 %v460, 0.5
        %v479 = vmul.f32 %v434, 0.5
        %v480 = vmul.f32 %v463, 0.5
        %v481 = vmul.f32 %v436, 0.5
        %v482 = vmul.f32 %v465, 0.5
        %v483 = vmul.f32 %v419, 0.70710677
        %v484 = vmul.f32 %v448, 0.70710677
        %v485 = vmul.f32 %v421, 0.70710677
        %v486 = vmul.f32 %v450, 0.70710677
        %v487 = vmul.f32 %v424, 0.70710677
        %v488 = vmul.f32 %v453, 0.70710677
        %v489 = vmul.f32 %v426, 0.70710677
        %v490 = vmul.f32 %v455, 0.70710677
        %v491 = vmul.f32 %v429, 0.70710677
        %v492 = vmul.f32 %v458, 0.70710677
        %v493 = vmul.f32 %v431, 0.70710677
        %v494 = vmul.f32 %v460, 0.70710677
        %v495 = vmul.f32 %v434, 0.70710677
        %v496 = vmul.f32 %v463, 0.70710677
        %v497 = vmul.f32 %v436, 0.70710677
        %v498 = vmul.f32 %v465, 0.70710677
        %vm499 = vcmp.lt.f32.partialorder %v483, 0.0
        %vm500 = vcmp.lt.f32.partialorder %v484, 0.0
        %vm501 = vcmp.lt.f32.partialorder %v485, 0.0
        %vm502 = vcmp.lt.f32.partialorder %v486, 0.0
        %vm503 = vcmp.lt.f32.partialorder %v487, 0.0
        %vm504 = vcmp.lt.f32.partialorder %v488, 0.0
        %vm505 = vcmp.lt.f32.partialorder %v489, 0.0
        %vm506 = vcmp.lt.f32.partialorder %v490, 0.0
        %vm507 = vcmp.lt.f32.partialorder %v491, 0.0
        %vm508 = vcmp.lt.f32.partialorder %v492, 0.0
        %vm509 = vcmp.lt.f32.partialorder %v493, 0.0
        %vm510 = vcmp.lt.f32.partialorder %v494, 0.0
        %vm511 = vcmp.lt.f32.partialorder %v495, 0.0
        %vm512 = vcmp.lt.f32.partialorder %v496, 0.0
        %vm513 = vcmp.lt.f32.partialorder %v497, 0.0
        %vm514 = vcmp.lt.f32.partialorder %v498, 0.0
        %v515 = vsel %vm499, -1.0, 1.0
        %v516 = vsel %vm500, -1.0, 1.0
        %v517 = vsel %vm501, -1.0, 1.0
        %v518 = vsel %vm502, -1.0, 1.0
        %v519 = vsel %vm503, -1.0, 1.0
        %v520 = vsel %vm504, -1.0, 1.0
        %v521 = vsel %vm505, -1.0, 1.0
        %v522 = vsel %vm506, -1.0, 1.0
        %v523 = vsel %vm507, -1.0, 1.0
        %v524 = vsel %vm508, -1.0, 1.0
        %v525 = vsel %vm509, -1.0, 1.0
        %v526 = vsel %vm510, -1.0, 1.0
        %v527 = vsel %vm511, -1.0, 1.0
        %v528 = vsel %vm512, -1.0, 1.0
        %v529 = vsel %vm513, -1.0, 1.0
        %v530 = vsel %vm514, -1.0, 1.0
        %v531 = vand.u32 2147483647, %v483
        %v532 = vand.u32 2147483647, %v484
        %v533 = vand.u32 2147483647, %v485
        %v534 = vand.u32 2147483647, %v486
        %v535 = vand.u32 2147483647, %v487
        %v536 = vand.u32 2147483647, %v488
        %v537 = vand.u32 2147483647, %v489
        %v538 = vand.u32 2147483647, %v490
        %v539 = vand.u32 2147483647, %v491
        %v540 = vand.u32 2147483647, %v492
        %v541 = vand.u32 2147483647, %v493
        %v542 = vand.u32 2147483647, %v494
        %v543 = vand.u32 2147483647, %v495
        %v544 = vand.u32 2147483647, %v496
        %v545 = vand.u32 2147483647, %v497
        %v546 = vand.u32 2147483647, %v498
        %v547 = vmul.f32 %v531, 0.3275911
        %v548 = vmul.f32 %v532, 0.3275911
        %v549 = vmul.f32 %v533, 0.3275911
        %v550 = vmul.f32 %v534, 0.3275911
        %v551 = vmul.f32 %v535, 0.3275911
        %v552 = vmul.f32 %v536, 0.3275911
        %v553 = vmul.f32 %v537, 0.3275911
        %v554 = vmul.f32 %v538, 0.3275911
        %v555 = vmul.f32 %v539, 0.3275911
        %v556 = vmul.f32 %v540, 0.3275911
        %v557 = vmul.f32 %v541, 0.3275911
        %v558 = vmul.f32 %v542, 0.3275911
        %v559 = vmul.f32 %v543, 0.3275911
        %v560 = vmul.f32 %v544, 0.3275911
        %v561 = vmul.f32 %v545, 0.3275911
        %v562 = vmul.f32 %v546, 0.3275911
        %v563 = vadd.f32 %v547, 1.0
        %v564 = vadd.f32 %v548, 1.0
        %v565 = vadd.f32 %v549, 1.0
        %v566 = vadd.f32 %v550, 1.0
        %v567 = vadd.f32 %v551, 1.0
        %v568 = vadd.f32 %v552, 1.0
        %v569 = vadd.f32 %v553, 1.0
        %v570 = vadd.f32 %v554, 1.0
        %v571 = vadd.f32 %v555, 1.0
        %v572 = vadd.f32 %v556, 1.0
        %v573 = vadd.f32 %v557, 1.0
        %v574 = vadd.f32 %v558, 1.0
        %v575 = vadd.f32 %v559, 1.0
        %v576 = vadd.f32 %v560, 1.0
        %v577 = vadd.f32 %v561, 1.0
        %v578 = vadd.f32 %v562, 1.0
        %v579 = vrcp.pop %v563
        %v580 = vmul.f32 %v563, %v579
        %v581 = vsub.f32 1.0, %v580
        %v582 = vmul.f32 %v579, %v581
        %v583 = vadd.f32 %v579, %v582
        %vm584 = vweird.f32 %v563
        %vm585 = vweird.f32 %v579
        %vm586 = vmor %vm584, %vm585
        %v587 = vsel %vm586, %v579, %v583
        %v588 = vand.u32 2147483647, %v563
        %vm589 = vcmp.eq.f32.partialorder %v588, 8.507059e+37
        %v590 = vand.u32 %v563, 2147483648
        %v591 = vor.u32 1.1754944e-38, %v590
        %v592 = vsel %vm589, %v591, %v587
        %v593 = vmul.f32 1.0, %v592
        %v594 = vrcp.pop %v564
        %v595 = vmul.f32 %v564, %v594
        %v596 = vsub.f32 1.0, %v595
        %v597 = vmul.f32 %v594, %v596
        %v598 = vadd.f32 %v594, %v597
        %vm599 = vweird.f32 %v564
        %vm600 = vweird.f32 %v594
        %vm601 = vmor %vm599, %vm600
        %v602 = vsel %vm601, %v594, %v598
        %v603 = vand.u32 2147483647, %v564
        %vm604 = vcmp.eq.f32.partialorder %v603, 8.507059e+37
        %v605 = vand.u32 %v564, 2147483648
        %v606 = vor.u32 1.1754944e-38, %v605
        %v607 = vsel %vm604, %v606, %v602
        %v608 = vmul.f32 1.0, %v607
        %v609 = vrcp.pop %v565
        %v610 = vmul.f32 %v565, %v609
        %v611 = vsub.f32 1.0, %v610
        %v612 = vmul.f32 %v609, %v611
        %v613 = vadd.f32 %v609, %v612
        %vm614 = vweird.f32 %v565
        %vm615 = vweird.f32 %v609
        %vm616 = vmor %vm614, %vm615
        %v617 = vsel %vm616, %v609, %v613
        %v618 = vand.u32 2147483647, %v565
        %vm619 = vcmp.eq.f32.partialorder %v618, 8.507059e+37
        %v620 = vand.u32 %v565, 2147483648
        %v621 = vor.u32 1.1754944e-38, %v620
        %v622 = vsel %vm619, %v621, %v617
        %v623 = vmul.f32 1.0, %v622
        %v624 = vrcp.pop %v566
        %v625 = vmul.f32 %v566, %v624
        %v626 = vsub.f32 1.0, %v625
        %v627 = vmul.f32 %v624, %v626
        %v628 = vadd.f32 %v624, %v627
        %vm629 = vweird.f32 %v566
        %vm630 = vweird.f32 %v624
        %vm631 = vmor %vm629, %vm630
        %v632 = vsel %vm631, %v624, %v628
        %v633 = vand.u32 2147483647, %v566
        %vm634 = vcmp.eq.f32.partialorder %v633, 8.507059e+37
        %v635 = vand.u32 %v566, 2147483648
        %v636 = vor.u32 1.1754944e-38, %v635
        %v637 = vsel %vm634, %v636, %v632
        %v638 = vmul.f32 1.0, %v637
        %v639 = vrcp.pop %v567
        %v640 = vmul.f32 %v567, %v639
        %v641 = vsub.f32 1.0, %v640
        %v642 = vmul.f32 %v639, %v641
        %v643 = vadd.f32 %v639, %v642
        %vm644 = vweird.f32 %v567
        %vm645 = vweird.f32 %v639
        %vm646 = vmor %vm644, %vm645
        %v647 = vsel %vm646, %v639, %v643
        %v648 = vand.u32 2147483647, %v567
        %vm649 = vcmp.eq.f32.partialorder %v648, 8.507059e+37
        %v650 = vand.u32 %v567, 2147483648
        %v651 = vor.u32 1.1754944e-38, %v650
        %v652 = vsel %vm649, %v651, %v647
        %v653 = vmul.f32 1.0, %v652
        %v654 = vrcp.pop %v568
        %v655 = vmul.f32 %v568, %v654
        %v656 = vsub.f32 1.0, %v655
        %v657 = vmul.f32 %v654, %v656
        %v658 = vadd.f32 %v654, %v657
        %vm659 = vweird.f32 %v568
        %vm660 = vweird.f32 %v654
        %vm661 = vmor %vm659, %vm660
        %v662 = vsel %vm661, %v654, %v658
        %v663 = vand.u32 2147483647, %v568
        %vm664 = vcmp.eq.f32.partialorder %v663, 8.507059e+37
        %v665 = vand.u32 %v568, 2147483648
        %v666 = vor.u32 1.1754944e-38, %v665
        %v667 = vsel %vm664, %v666, %v662
        %v668 = vmul.f32 1.0, %v667
        %v669 = vrcp.pop %v569
        %v670 = vmul.f32 %v569, %v669
        %v671 = vsub.f32 1.0, %v670
        %v672 = vmul.f32 %v669, %v671
        %v673 = vadd.f32 %v669, %v672
        %vm674 = vweird.f32 %v569
        %vm675 = vweird.f32 %v669
        %vm676 = vmor %vm674, %vm675
        %v677 = vsel %vm676, %v669, %v673
        %v678 = vand.u32 2147483647, %v569
        %vm679 = vcmp.eq.f32.partialorder %v678, 8.507059e+37
        %v680 = vand.u32 %v569, 2147483648
        %v681 = vor.u32 1.1754944e-38, %v680
        %v682 = vsel %vm679, %v681, %v677
        %v683 = vmul.f32 1.0, %v682
        %v684 = vrcp.pop %v570
        %v685 = vmul.f32 %v570, %v684
        %v686 = vsub.f32 1.0, %v685
        %v687 = vmul.f32 %v684, %v686
        %v688 = vadd.f32 %v684, %v687
        %vm689 = vweird.f32 %v570
        %vm690 = vweird.f32 %v684
        %vm691 = vmor %vm689, %vm690
        %v692 = vsel %vm691, %v684, %v688
        %v693 = vand.u32 2147483647, %v570
        %vm694 = vcmp.eq.f32.partialorder %v693, 8.507059e+37
        %v695 = vand.u32 %v570, 2147483648
        %v696 = vor.u32 1.1754944e-38, %v695
        %v697 = vsel %vm694, %v696, %v692
        %v698 = vmul.f32 1.0, %v697
        %v699 = vrcp.pop %v571
        %v700 = vmul.f32 %v571, %v699
        %v701 = vsub.f32 1.0, %v700
        %v702 = vmul.f32 %v699, %v701
        %v703 = vadd.f32 %v699, %v702
        %vm704 = vweird.f32 %v571
        %vm705 = vweird.f32 %v699
        %vm706 = vmor %vm704, %vm705
        %v707 = vsel %vm706, %v699, %v703
        %v708 = vand.u32 2147483647, %v571
        %vm709 = vcmp.eq.f32.partialorder %v708, 8.507059e+37
        %v710 = vand.u32 %v571, 2147483648
        %v711 = vor.u32 1.1754944e-38, %v710
        %v712 = vsel %vm709, %v711, %v707
        %v713 = vmul.f32 1.0, %v712
        %v714 = vrcp.pop %v572
        %v715 = vmul.f32 %v572, %v714
        %v716 = vsub.f32 1.0, %v715
        %v717 = vmul.f32 %v714, %v716
        %v718 = vadd.f32 %v714, %v717
        %vm719 = vweird.f32 %v572
        %vm720 = vweird.f32 %v714
        %vm721 = vmor %vm719, %vm720
        %v722 = vsel %vm721, %v714, %v718
        %v723 = vand.u32 2147483647, %v572
        %vm724 = vcmp.eq.f32.partialorder %v723, 8.507059e+37
        %v725 = vand.u32 %v572, 2147483648
        %v726 = vor.u32 1.1754944e-38, %v725
        %v727 = vsel %vm724, %v726, %v722
        %v728 = vmul.f32 1.0, %v727
        %v729 = vrcp.pop %v573
        %v730 = vmul.f32 %v573, %v729
        %v731 = vsub.f32 1.0, %v730
        %v732 = vmul.f32 %v729, %v731
        %v733 = vadd.f32 %v729, %v732
        %vm734 = vweird.f32 %v573
        %vm735 = vweird.f32 %v729
        %vm736 = vmor %vm734, %vm735
        %v737 = vsel %vm736, %v729, %v733
        %v738 = vand.u32 2147483647, %v573
        %vm739 = vcmp.eq.f32.partialorder %v738, 8.507059e+37
        %v740 = vand.u32 %v573, 2147483648
        %v741 = vor.u32 1.1754944e-38, %v740
        %v742 = vsel %vm739, %v741, %v737
        %v743 = vmul.f32 1.0, %v742
        %v744 = vrcp.pop %v574
        %v745 = vmul.f32 %v574, %v744
        %v746 = vsub.f32 1.0, %v745
        %v747 = vmul.f32 %v744, %v746
        %v748 = vadd.f32 %v744, %v747
        %vm749 = vweird.f32 %v574
        %vm750 = vweird.f32 %v744
        %vm751 = vmor %vm749, %vm750
        %v752 = vsel %vm751, %v744, %v748
        %v753 = vand.u32 2147483647, %v574
        %vm754 = vcmp.eq.f32.partialorder %v753, 8.507059e+37
        %v755 = vand.u32 %v574, 2147483648
        %v756 = vor.u32 1.1754944e-38, %v755
        %v757 = vsel %vm754, %v756, %v752
        %v758 = vmul.f32 1.0, %v757
        %v759 = vrcp.pop %v575
        %v760 = vmul.f32 %v575, %v759
        %v761 = vsub.f32 1.0, %v760
        %v762 = vmul.f32 %v759, %v761
        %v763 = vadd.f32 %v759, %v762
        %vm764 = vweird.f32 %v575
        %vm765 = vweird.f32 %v759
        %vm766 = vmor %vm764, %vm765
        %v767 = vsel %vm766, %v759, %v763
        %v768 = vand.u32 2147483647, %v575
        %vm769 = vcmp.eq.f32.partialorder %v768, 8.507059e+37
        %v770 = vand.u32 %v575, 2147483648
        %v771 = vor.u32 1.1754944e-38, %v770
        %v772 = vsel %vm769, %v771, %v767
        %v773 = vmul.f32 1.0, %v772
        %v774 = vrcp.pop %v576
        %v775 = vmul.f32 %v576, %v774
        %v776 = vsub.f32 1.0, %v775
        %v777 = vmul.f32 %v774, %v776
        %v778 = vadd.f32 %v774, %v777
        %vm779 = vweird.f32 %v576
        %vm780 = vweird.f32 %v774
        %vm781 = vmor %vm779, %vm780
        %v782 = vsel %vm781, %v774, %v778
        %v783 = vand.u32 2147483647, %v576
        %vm784 = vcmp.eq.f32.partialorder %v783, 8.507059e+37
        %v785 = vand.u32 %v576, 2147483648
        %v786 = vor.u32 1.1754944e-38, %v785
        %v787 = vsel %vm784, %v786, %v782
        %v788 = vmul.f32 1.0, %v787
        %v789 = vrcp.pop %v577
        %v790 = vmul.f32 %v577, %v789
        %v791 = vsub.f32 1.0, %v790
        %v792 = vmul.f32 %v789, %v791
        %v793 = vadd.f32 %v789, %v792
        %vm794 = vweird.f32 %v577
        %vm795 = vweird.f32 %v789
        %vm796 = vmor %vm794, %vm795
        %v797 = vsel %vm796, %v789, %v793
        %v798 = vand.u32 2147483647, %v577
        %vm799 = vcmp.eq.f32.partialorder %v798, 8.507059e+37
        %v800 = vand.u32 %v577, 2147483648
        %v801 = vor.u32 1.1754944e-38, %v800
        %v802 = vsel %vm799, %v801, %v797
        %v803 = vmul.f32 1.0, %v802
        %v804 = vrcp.pop %v578
        %v805 = vmul.f32 %v578, %v804
        %v806 = vsub.f32 1.0, %v805
        %v807 = vmul.f32 %v804, %v806
        %v808 = vadd.f32 %v804, %v807
        %vm809 = vweird.f32 %v578
        %vm810 = vweird.f32 %v804
        %vm811 = vmor %vm809, %vm810
        %v812 = vsel %vm811, %v804, %v808
        %v813 = vand.u32 2147483647, %v578
        %vm814 = vcmp.eq.f32.partialorder %v813, 8.507059e+37
        %v815 = vand.u32 %v578, 2147483648
        %v816 = vor.u32 1.1754944e-38, %v815
        %v817 = vsel %vm814, %v816, %v812
        %v818 = vmul.f32 1.0, %v817
        %v819 = vmul.f32 %v593, 1.0614054
        %v820 = vmul.f32 %v608, 1.0614054
        %v821 = vmul.f32 %v623, 1.0614054
        %v822 = vmul.f32 %v638, 1.0614054
        %v823 = vmul.f32 %v653, 1.0614054
        %v824 = vmul.f32 %v668, 1.0614054
        %v825 = vmul.f32 %v683, 1.0614054
        %v826 = vmul.f32 %v698, 1.0614054
        %v827 = vmul.f32 %v713, 1.0614054
        %v828 = vmul.f32 %v728, 1.0614054
        %v829 = vmul.f32 %v743, 1.0614054
        %v830 = vmul.f32 %v758, 1.0614054
        %v831 = vmul.f32 %v773, 1.0614054
        %v832 = vmul.f32 %v788, 1.0614054
        %v833 = vmul.f32 %v803, 1.0614054
        %v834 = vmul.f32 %v818, 1.0614054
        %v835 = vadd.f32 %v819, -1.4531521
        %v836 = vadd.f32 %v820, -1.4531521
        %v837 = vadd.f32 %v821, -1.4531521
        %v838 = vadd.f32 %v822, -1.4531521
        %v839 = vadd.f32 %v823, -1.4531521
        %v840 = vadd.f32 %v824, -1.4531521
        %v841 = vadd.f32 %v825, -1.4531521
        %v842 = vadd.f32 %v826, -1.4531521
        %v843 = vadd.f32 %v827, -1.4531521
        %v844 = vadd.f32 %v828, -1.4531521
        %v845 = vadd.f32 %v829, -1.4531521
        %v846 = vadd.f32 %v830, -1.4531521
        %v847 = vadd.f32 %v831, -1.4531521
        %v848 = vadd.f32 %v832, -1.4531521
        %v849 = vadd.f32 %v833, -1.4531521
        %v850 = vadd.f32 %v834, -1.4531521
        %v851 = vmul.f32 %v835, %v593
        %v852 = vmul.f32 %v836, %v608
        %v853 = vmul.f32 %v837, %v623
        %v854 = vmul.f32 %v838, %v638
        %v855 = vmul.f32 %v839, %v653
        %v856 = vmul.f32 %v840, %v668
        %v857 = vmul.f32 %v841, %v683
        %v858 = vmul.f32 %v842, %v698
        %v859 = vmul.f32 %v843, %v713
        %v860 = vmul.f32 %v844, %v728
        %v861 = vmul.f32 %v845, %v743
        %v862 = vmul.f32 %v846, %v758
        %v863 = vmul.f32 %v847, %v773
        %v864 = vmul.f32 %v848, %v788
        %v865 = vmul.f32 %v849, %v803
        %v866 = vmul.f32 %v850, %v818
        %v867 = vadd.f32 %v851, 1.4214138
        %v868 = vadd.f32 %v852, 1.4214138
        %v869 = vadd.f32 %v853, 1.4214138
        %v870 = vadd.f32 %v854, 1.4214138
        %v871 = vadd.f32 %v855, 1.4214138
        %v872 = vadd.f32 %v856, 1.4214138
        %v873 = vadd.f32 %v857, 1.4214138
        %v874 = vadd.f32 %v858, 1.4214138
        %v875 = vadd.f32 %v859, 1.4214138
        %v876 = vadd.f32 %v860, 1.4214138
        %v877 = vadd.f32 %v861, 1.4214138
        %v878 = vadd.f32 %v862, 1.4214138
        %v879 = vadd.f32 %v863, 1.4214138
        %v880 = vadd.f32 %v864, 1.4214138
        %v881 = vadd.f32 %v865, 1.4214138
        %v882 = vadd.f32 %v866, 1.4214138
        %v883 = vmul.f32 %v867, %v593
        %v884 = vmul.f32 %v868, %v608
        %v885 = vmul.f32 %v869, %v623
        %v886 = vmul.f32 %v870, %v638
        %v887 = vmul.f32 %v871, %v653
        %v888 = vmul.f32 %v872, %v668
        %v889 = vmul.f32 %v873, %v683
        %v890 = vmul.f32 %v874, %v698
        %v891 = vmul.f32 %v875, %v713
        %v892 = vmul.f32 %v876, %v728
        %v893 = vmul.f32 %v877, %v743
        %v894 = vmul.f32 %v878, %v758
        %v895 = vmul.f32 %v879, %v773
        %v896 = vmul.f32 %v880, %v788
        %v897 = vmul.f32 %v881, %v803
        %v898 = vmul.f32 %v882, %v818
        %v899 = vadd.f32 %v883, -0.28449672
        %v900 = vadd.f32 %v884, -0.28449672
        %v901 = vadd.f32 %v885, -0.28449672
        %v902 = vadd.f32 %v886, -0.28449672
        %v903 = vadd.f32 %v887, -0.28449672
        %v904 = vadd.f32 %v888, -0.28449672
        %v905 = vadd.f32 %v889, -0.28449672
        %v906 = vadd.f32 %v890, -0.28449672
        %v907 = vadd.f32 %v891, -0.28449672
        %v908 = vadd.f32 %v892, -0.28449672
        %v909 = vadd.f32 %v893, -0.28449672
        %v910 = vadd.f32 %v894, -0.28449672
        %v911 = vadd.f32 %v895, -0.28449672
        %v912 = vadd.f32 %v896, -0.28449672
        %v913 = vadd.f32 %v897, -0.28449672
        %v914 = vadd.f32 %v898, -0.28449672
        %v915 = vmul.f32 %v899, %v593
        %v916 = vmul.f32 %v900, %v608
        %v917 = vmul.f32 %v901, %v623
        %v918 = vmul.f32 %v902, %v638
        %v919 = vmul.f32 %v903, %v653
        %v920 = vmul.f32 %v904, %v668
        %v921 = vmul.f32 %v905, %v683
        %v922 = vmul.f32 %v906, %v698
        %v923 = vmul.f32 %v907, %v713
        %v924 = vmul.f32 %v908, %v728
        %v925 = vmul.f32 %v909, %v743
        %v926 = vmul.f32 %v910, %v758
        %v927 = vmul.f32 %v911, %v773
        %v928 = vmul.f32 %v912, %v788
        %v929 = vmul.f32 %v913, %v803
        %v930 = vmul.f32 %v914, %v818
        %v931 = vadd.f32 %v915, 0.2548296
        %v932 = vadd.f32 %v916, 0.2548296
        %v933 = vadd.f32 %v917, 0.2548296
        %v934 = vadd.f32 %v918, 0.2548296
        %v935 = vadd.f32 %v919, 0.2548296
        %v936 = vadd.f32 %v920, 0.2548296
        %v937 = vadd.f32 %v921, 0.2548296
        %v938 = vadd.f32 %v922, 0.2548296
        %v939 = vadd.f32 %v923, 0.2548296
        %v940 = vadd.f32 %v924, 0.2548296
        %v941 = vadd.f32 %v925, 0.2548296
        %v942 = vadd.f32 %v926, 0.2548296
        %v943 = vadd.f32 %v927, 0.2548296
        %v944 = vadd.f32 %v928, 0.2548296
        %v945 = vadd.f32 %v929, 0.2548296
        %v946 = vadd.f32 %v930, 0.2548296
        %v947 = vmul.f32 %v931, %v593
        %v948 = vmul.f32 %v932, %v608
        %v949 = vmul.f32 %v933, %v623
        %v950 = vmul.f32 %v934, %v638
        %v951 = vmul.f32 %v935, %v653
        %v952 = vmul.f32 %v936, %v668
        %v953 = vmul.f32 %v937, %v683
        %v954 = vmul.f32 %v938, %v698
        %v955 = vmul.f32 %v939, %v713
        %v956 = vmul.f32 %v940, %v728
        %v957 = vmul.f32 %v941, %v743
        %v958 = vmul.f32 %v942, %v758
        %v959 = vmul.f32 %v943, %v773
        %v960 = vmul.f32 %v944, %v788
        %v961 = vmul.f32 %v945, %v803
        %v962 = vmul.f32 %v946, %v818
        %v963 = vsub.f32 0.0, %v531
        %v964 = vsub.f32 0.0, %v532
        %v965 = vsub.f32 0.0, %v533
        %v966 = vsub.f32 0.0, %v534
        %v967 = vsub.f32 0.0, %v535
        %v968 = vsub.f32 0.0, %v536
        %v969 = vsub.f32 0.0, %v537
        %v970 = vsub.f32 0.0, %v538
        %v971 = vsub.f32 0.0, %v539
        %v972 = vsub.f32 0.0, %v540
        %v973 = vsub.f32 0.0, %v541
        %v974 = vsub.f32 0.0, %v542
        %v975 = vsub.f32 0.0, %v543
        %v976 = vsub.f32 0.0, %v544
        %v977 = vsub.f32 0.0, %v545
        %v978 = vsub.f32 0.0, %v546
        %v979 = vmul.f32 %v963, %v531
        %v980 = vmul.f32 %v964, %v532
        %v981 = vmul.f32 %v965, %v533
        %v982 = vmul.f32 %v966, %v534
        %v983 = vmul.f32 %v967, %v535
        %v984 = vmul.f32 %v968, %v536
        %v985 = vmul.f32 %v969, %v537
        %v986 = vmul.f32 %v970, %v538
        %v987 = vmul.f32 %v971, %v539
        %v988 = vmul.f32 %v972, %v540
        %v989 = vmul.f32 %v973, %v541
        %v990 = vmul.f32 %v974, %v542
        %v991 = vmul.f32 %v975, %v543
        %v992 = vmul.f32 %v976, %v544
        %v993 = vmul.f32 %v977, %v545
        %v994 = vmul.f32 %v978, %v546
        %v995 = vmul.f32 %v979, 1.442695
        %v996 = vpow.pop %v995
        %v997 = vmul.f32 %v980, 1.442695
        %v998 = vpow.pop %v997
        %v999 = vmul.f32 %v981, 1.442695
        %v1000 = vpow.pop %v999
        %v1001 = vmul.f32 %v982, 1.442695
        %v1002 = vpow.pop %v1001
        %v1003 = vmul.f32 %v983, 1.442695
        %v1004 = vpow.pop %v1003
        %v1005 = vmul.f32 %v984, 1.442695
        %v1006 = vpow.pop %v1005
        %v1007 = vmul.f32 %v985, 1.442695
        %v1008 = vpow.pop %v1007
        %v1009 = vmul.f32 %v986, 1.442695
        %v1010 = vpow.pop %v1009
        %v1011 = vmul.f32 %v987, 1.442695
        %v1012 = vpow.pop %v1011
        %v1013 = vmul.f32 %v988, 1.442695
        %v1014 = vpow.pop %v1013
        %v1015 = vmul.f32 %v989, 1.442695
        %v1016 = vpow.pop %v1015
        %v1017 = vmul.f32 %v990, 1.442695
        %v1018 = vpow.pop %v1017
        %v1019 = vmul.f32 %v991, 1.442695
        %v1020 = vpow.pop %v1019
        %v1021 = vmul.f32 %v992, 1.442695
        %v1022 = vpow.pop %v1021
        %v1023 = vmul.f32 %v993, 1.442695
        %v1024 = vpow.pop %v1023
        %v1025 = vmul.f32 %v994, 1.442695
        %v1026 = vpow.pop %v1025
        %v1027 = vmul.f32 %v947, %v996
        %v1028 = vmul.f32 %v948, %v998
        %v1029 = vmul.f32 %v949, %v1000
        %v1030 = vmul.f32 %v950, %v1002
        %v1031 = vmul.f32 %v951, %v1004
        %v1032 = vmul.f32 %v952, %v1006
        %v1033 = vmul.f32 %v953, %v1008
        %v1034 = vmul.f32 %v954, %v1010
        %v1035 = vmul.f32 %v955, %v1012
        %v1036 = vmul.f32 %v956, %v1014
        %v1037 = vmul.f32 %v957, %v1016
        %v1038 = vmul.f32 %v958, %v1018
        %v1039 = vmul.f32 %v959, %v1020
        %v1040 = vmul.f32 %v960, %v1022
        %v1041 = vmul.f32 %v961, %v1024
        %v1042 = vmul.f32 %v962, %v1026
        %v1043 = vsub.f32 1.0, %v1027
        %v1044 = vsub.f32 1.0, %v1028
        %v1045 = vsub.f32 1.0, %v1029
        %v1046 = vsub.f32 1.0, %v1030
        %v1047 = vsub.f32 1.0, %v1031
        %v1048 = vsub.f32 1.0, %v1032
        %v1049 = vsub.f32 1.0, %v1033
        %v1050 = vsub.f32 1.0, %v1034
        %v1051 = vsub.f32 1.0, %v1035
        %v1052 = vsub.f32 1.0, %v1036
        %v1053 = vsub.f32 1.0, %v1037
        %v1054 = vsub.f32 1.0, %v1038
        %v1055 = vsub.f32 1.0, %v1039
        %v1056 = vsub.f32 1.0, %v1040
        %v1057 = vsub.f32 1.0, %v1041
        %v1058 = vsub.f32 1.0, %v1042
        %v1059 = vmul.f32 %v515, %v1043
        %v1060 = vmul.f32 %v516, %v1044
        %v1061 = vmul.f32 %v517, %v1045
        %v1062 = vmul.f32 %v518, %v1046
        %v1063 = vmul.f32 %v519, %v1047
        %v1064 = vmul.f32 %v520, %v1048
        %v1065 = vmul.f32 %v521, %v1049
        %v1066 = vmul.f32 %v522, %v1050
        %v1067 = vmul.f32 %v523, %v1051
        %v1068 = vmul.f32 %v524, %v1052
        %v1069 = vmul.f32 %v525, %v1053
        %v1070 = vmul.f32 %v526, %v1054
        %v1071 = vmul.f32 %v527, %v1055
        %v1072 = vmul.f32 %v528, %v1056
        %v1073 = vmul.f32 %v529, %v1057
        %v1074 = vmul.f32 %v530, %v1058
        %v1075 = vadd.f32 %v1059, 1.0
        %v1076 = vadd.f32 %v1060, 1.0
        %v1077 = vadd.f32 %v1061, 1.0
        %v1078 = vadd.f32 %v1062, 1.0
        %v1079 = vadd.f32 %v1063, 1.0
        %v1080 = vadd.f32 %v1064, 1.0
        %v1081 = vadd.f32 %v1065, 1.0
        %v1082 = vadd.f32 %v1066, 1.0
        %v1083 = vadd.f32 %v1067, 1.0
        %v1084 = vadd.f32 %v1068, 1.0
        %v1085 = vadd.f32 %v1069, 1.0
        %v1086 = vadd.f32 %v1070, 1.0
        %v1087 = vadd.f32 %v1071, 1.0
        %v1088 = vadd.f32 %v1072, 1.0
        %v1089 = vadd.f32 %v1073, 1.0
        %v1090 = vadd.f32 %v1074, 1.0
        %v1091 = vmul.f32 %v467, %v1075
        %v1092 = vmul.f32 %v468, %v1076
        %v1093 = vmul.f32 %v469, %v1077
        %v1094 = vmul.f32 %v470, %v1078
        %v1095 = vmul.f32 %v471, %v1079
        %v1096 = vmul.f32 %v472, %v1080
        %v1097 = vmul.f32 %v473, %v1081
        %v1098 = vmul.f32 %v474, %v1082
        %v1099 = vmul.f32 %v475, %v1083
        %v1100 = vmul.f32 %v476, %v1084
        %v1101 = vmul.f32 %v477, %v1085
        %v1102 = vmul.f32 %v478, %v1086
        %v1103 = vmul.f32 %v479, %v1087
        %v1104 = vmul.f32 %v480, %v1088
        %v1105 = vmul.f32 %v481, %v1089
        %v1106 = vmul.f32 %v482, %v1090
        %v1107 = vpack.c.bf16 %v1093, %v1091
        %v1108 = vpack.c.bf16 %v1094, %v1092
        %v1109 = vpack.c.bf16 %v1097, %v1095
        %v1110 = vpack.c.bf16 %v1098, %v1096
        %v1111 = vpack.c.bf16 %v1101, %v1099
        %v1112 = vpack.c.bf16 %v1102, %v1100
        %v1113 = vpack.c.bf16 %v1105, %v1103
        %v1114 = vpack.c.bf16 %v1106, %v1104
        %v1115 = vld [vmem:[#allocation8] sm:$0xf]
        %v1116 = vld [vmem:[#allocation8 + $0x4] sm:$0xf]
        %v1117 = vld [vmem:[#allocation8 + $0x8] sm:$0xf]
        %v1118 = vld [vmem:[#allocation8 + $0xc] sm:$0xf]
        %v1119 = vld [vmem:[#allocation8 + $0x10] sm:$0xf]
        %v1120 = vld [vmem:[#allocation8 + $0x14] sm:$0xf]
        %v1121 = vld [vmem:[#allocation8 + $0x18] sm:$0xf]
        %v1122 = vld [vmem:[#allocation8 + $0x1c] sm:$0xf]
        %v1123 = vld [vmem:[#allocation8 + $0x20] sm:$0xf]
        %v1124 = vld [vmem:[#allocation8 + $0x24] sm:$0xf]
        %v1125 = vld [vmem:[#allocation8 + $0x28] sm:$0xf]
        %v1126 = vld [vmem:[#allocation8 + $0x2c] sm:$0xf]
        %v1127 = vld [vmem:[#allocation8 + $0x30] sm:$0xf]
        %v1128 = vld [vmem:[#allocation8 + $0x34] sm:$0xf]
        %v1129 = vld [vmem:[#allocation8 + $0x38] sm:$0xf]
        %v1130 = vld [vmem:[#allocation8 + $0x3c] sm:$0xf]
        %v1131 = vld [vmem:[#allocation8 + $0x40] sm:$0xf]
        %v1132 = vld [vmem:[#allocation8 + $0x44] sm:$0xf]
        %v1133 = vld [vmem:[#allocation8 + $0x48] sm:$0xf]
        %v1134 = vld [vmem:[#allocation8 + $0x4c] sm:$0xf]
        %v1135 = vld [vmem:[#allocation8 + $0x50] sm:$0xf]
        %v1136 = vld [vmem:[#allocation8 + $0x54] sm:$0xf]
        %v1137 = vld [vmem:[#allocation8 + $0x58] sm:$0xf]
        %v1138 = vld [vmem:[#allocation8 + $0x5c] sm:$0xf]
        %v1139 = vld [vmem:[#allocation8 + $0x60] sm:$0xf]
        %v1140 = vld [vmem:[#allocation8 + $0x64] sm:$0xf]
        %v1141 = vld [vmem:[#allocation8 + $0x68] sm:$0xf]
        %v1142 = vld [vmem:[#allocation8 + $0x6c] sm:$0xf]
        %v1143 = vld [vmem:[#allocation8 + $0x70] sm:$0xf]
        %v1144 = vld [vmem:[#allocation8 + $0x74] sm:$0xf]
        %v1145 = vld [vmem:[#allocation8 + $0x78] sm:$0xf]
        %v1146 = vld [vmem:[#allocation8 + $0x7c] sm:$0xf]
        %v1147 = vld [vmem:[%s4] sm:$0x1]
        %v1149 = vperm.slane %v1147, 0
        %v1183 = vunpack.c.l.b16 %v1115
        %v1184 = vunpack.c.l.b16 %v1116
        %v1185 = vunpack.c.l.b16 %v1117
        %v1186 = vunpack.c.l.b16 %v1118
        %v1187 = vunpack.c.l.b16 %v1119
        %v1188 = vunpack.c.l.b16 %v1120
        %v1189 = vunpack.c.l.b16 %v1121
        %v1190 = vunpack.c.l.b16 %v1122
        %v1191 = vunpack.c.l.b16 %v1123
        %v1192 = vunpack.c.l.b16 %v1124
        %v1193 = vunpack.c.l.b16 %v1125
        %v1194 = vunpack.c.l.b16 %v1126
        %v1195 = vunpack.c.l.b16 %v1127
        %v1196 = vunpack.c.l.b16 %v1128
        %v1197 = vunpack.c.l.b16 %v1129
        %v1198 = vunpack.c.l.b16 %v1130
        %v1199 = vunpack.c.l.b16 %v1131
        %v1200 = vunpack.c.l.b16 %v1132
        %v1201 = vunpack.c.l.b16 %v1133
        %v1202 = vunpack.c.l.b16 %v1134
        %v1203 = vunpack.c.l.b16 %v1135
        %v1204 = vunpack.c.l.b16 %v1136
        %v1205 = vunpack.c.l.b16 %v1137
        %v1206 = vunpack.c.l.b16 %v1138
        %v1207 = vunpack.c.l.b16 %v1139
        %v1208 = vunpack.c.l.b16 %v1140
        %v1209 = vunpack.c.l.b16 %v1141
        %v1210 = vunpack.c.l.b16 %v1142
        %v1211 = vunpack.c.l.b16 %v1143
        %v1212 = vunpack.c.l.b16 %v1144
        %v1213 = vunpack.c.l.b16 %v1145
        %v1214 = vunpack.c.l.b16 %v1146
        %v1215 = vpack.c.b16 %v1184, %v1183
        %v1216 = vpack.c.b16 %v1186, %v1185
        %v1217 = vpack.c.b16 %v1188, %v1187
        %v1218 = vpack.c.b16 %v1190, %v1189
        %v1219 = vpack.c.b16 %v1192, %v1191
        %v1220 = vpack.c.b16 %v1194, %v1193
        %v1221 = vpack.c.b16 %v1196, %v1195
        %v1222 = vpack.c.b16 %v1198, %v1197
        %v1223 = vpack.c.b16 %v1200, %v1199
        %v1224 = vpack.c.b16 %v1202, %v1201
        %v1225 = vpack.c.b16 %v1204, %v1203
        %v1226 = vpack.c.b16 %v1206, %v1205
        %v1227 = vpack.c.b16 %v1208, %v1207
        %v1228 = vpack.c.b16 %v1210, %v1209
        %v1229 = vpack.c.b16 %v1212, %v1211
        %v1230 = vpack.c.b16 %v1214, %v1213
        %1247 = vmatpush.bf16.msra.mxu0 %v1222
        %1248 = vmatpush.bf16.msra.mxu0 %v1221
        %1249 = vmatpush.bf16.msra.mxu0 %v1220
        %1250 = vmatpush.bf16.msra.mxu0 %v1219
        %1251 = vmatpush.bf16.msra.mxu0 %v1218
        %1252 = vmatpush.bf16.msra.mxu0 %v1217
        %1253 = vmatpush.bf16.msra.mxu0 %v1216
        %1254 = vmatpush.bf16.msra.mxu0 %v1215
        %1255 = vmatmul.bf16.gmra.mxu0 %v1107
        %v1256 = vpop.f32.mrf.mxu0
        %v1257 = vadd.f32 %v1149, %v1256
        %v1258 = vpop.f32.mrf.mxu0
        %v1259 = vadd.f32 %v1149, %v1258
        %1260 = vmatmul.bf16.gmra.mxu0 %v1109
        %v1261 = vpop.f32.mrf.mxu0
        %v1262 = vadd.f32 %v1149, %v1261
        %v1263 = vpop.f32.mrf.mxu0
        %v1264 = vadd.f32 %v1149, %v1263
        %1265 = vmatmul.bf16.gmra.mxu0 %v1111
        %v1266 = vpop.f32.mrf.mxu0
        %v1267 = vadd.f32 %v1149, %v1266
        %v1268 = vpop.f32.mrf.mxu0
        %v1269 = vadd.f32 %v1149, %v1268
        %1270 = vmatmul.bf16.gmra.mxu0 %v1113
        %v1271 = vpop.f32.mrf.mxu0
        %v1272 = vadd.f32 %v1149, %v1271
        %v1273 = vpop.f32.mrf.mxu0
        %v1274 = vadd.f32 %v1149, %v1273
        %1275 = vdwg.mxu0
        %1276 = vmatpush.bf16.msra.mxu0 %v1230
        %1277 = vmatpush.bf16.msra.mxu0 %v1229
        %1278 = vmatpush.bf16.msra.mxu0 %v1228
        %1279 = vmatpush.bf16.msra.mxu0 %v1227
        %1280 = vmatpush.bf16.msra.mxu0 %v1226
        %1281 = vmatpush.bf16.msra.mxu0 %v1225
        %1282 = vmatpush.bf16.msra.mxu0 %v1224
        %1283 = vmatpush.bf16.msra.mxu0 %v1223
        %1284 = vmatmul.bf16.gmra.mxu0 %v1108
        %v1285 = vpop.f32.mrf.mxu0
        %v1286 = vadd.f32 %v1257, %v1285
        %v1287 = vpop.f32.mrf.mxu0
        %v1288 = vadd.f32 %v1259, %v1287
        %1289 = vmatmul.bf16.gmra.mxu0 %v1110
        %v1290 = vpop.f32.mrf.mxu0
        %v1291 = vadd.f32 %v1262, %v1290
        %v1292 = vpop.f32.mrf.mxu0
        %v1293 = vadd.f32 %v1264, %v1292
        %1294 = vmatmul.bf16.gmra.mxu0 %v1112
        %v1295 = vpop.f32.mrf.mxu0
        %v1296 = vadd.f32 %v1267, %v1295
        %v1297 = vpop.f32.mrf.mxu0
        %v1298 = vadd.f32 %v1269, %v1297
        %1299 = vmatmul.bf16.gmra.mxu0 %v1114
        %v1300 = vpop.f32.mrf.mxu0
        %v1301 = vadd.f32 %v1272, %v1300
        %v1302 = vpop.f32.mrf.mxu0
        %v1303 = vadd.f32 %v1274, %v1302
        %1304 = vdwg.mxu0
        %1305 = vst [vmem:[%s292] sm:$0xff] %v1286
        %1306 = vst [vmem:[%s292 + $0x8] sm:$0xff] %v1288
        %1307 = vst [vmem:[%s292 + $0x10] sm:$0xff] %v1291
        %1308 = vst [vmem:[%s292 + $0x18] sm:$0xff] %v1293
        %1309 = vst [vmem:[%s292 + $0x20] sm:$0xff] %v1296
        %1310 = vst [vmem:[%s292 + $0x28] sm:$0xff] %v1298
        %1311 = vst [vmem:[%s292 + $0x30] sm:$0xff] %v1301
        %1312 = vst [vmem:[%s292 + $0x38] sm:$0xff] %v1303
        %s1313 = sand.u32 %s142, 1
        %s1314 = scalar_lea.sflag [#allocation4], %s1313
        %s1315 = sand.u32 %s142, 1
        %s1316 = smul.addr %s1315, 64
        %s1317 = scalar_lea.vmem [#allocation10], %s1316
        // Predicated region
        $region57: #{tpu_custom_call.1} parent=39 // pred_check
          %p1318 = pneg %p152
        $region58: #{tpu_custom_call.1} parent=39 // pred_check_branch
          %1320 = sbr.rel (%p1318) target = $region60
        $region59: #{tpu_custom_call.1} parent=39 // pred_region
          %s1321 = smul.u32 8, %s24
          %1323 = vsyncadd %s1314, 0
          %s1324 = smul.addr %s1321, 8
          %s1325 = scalar_lea.hbm %s5, %s1324
          %s1326 = sshll.u32 %s1317, 4
          %s1327 = int_to_ptr.vmem [resolvable:$true] %s1326
          %s1328 = sshll.u32 %s1325, 4
          %s1329 = int_to_ptr.hbm [resolvable:$true] %s1328
          %1334 = dma.vmem_to_hbm [thread:$0]  %s1327, 1024, %s1329, %s1314, 128, 128, 8
        $region60: #{tpu_custom_call.1} parent=39 // pred_fallthru
          _
      $region40: #{tpu_custom_call.1} parent=5 // pred_fallthru
        _
      %p1335 = scmp.le.s32.totalorder 2, %s19
      // Predicated region
      $region61: #{tpu_custom_call.1} parent=5 // pred_check
        %p1336 = pneg %p1335
      $region62: #{tpu_custom_call.1} parent=5 // pred_check_branch
        %1338 = sbr.rel (%p1336) target = $region64
      $region63: #{tpu_custom_call.1} parent=5 // pred_region
        %s1339 = ssub.s32 %s19, 2
        // Predicated region
        $region65: #{tpu_custom_call.1} parent=63 // pred_check
          %p1340 = pneg %p158
        $region66: #{tpu_custom_call.1} parent=63 // pred_check_branch
          %1342 = sbr.rel (%p1340) target = $region68
        $region67: #{tpu_custom_call.1} parent=63 // pred_region
          %s1343 = sand.u32 %s143, 1
          %s1344 = scalar_lea.sflag [#allocation4], %s1343
          %s1345 = sand.u32 %s143, 1
          %s1346 = smul.addr %s1345, 64
          %s1347 = scalar_lea.vmem [#allocation10], %s1346
          %1349 = dma.done %s1344, 1024
        $region68: #{tpu_custom_call.1} parent=63 // pred_fallthru
          _
      $region64: #{tpu_custom_call.1} parent=5 // pred_fallthru
        _
    $region6: #{tpu_custom_call.1} parent=1 // loop_footer
      %s23 = sadd.s32 1, %s19
    $region7: #{tpu_custom_call.1} parent=1 // loop_footer_branch
      %18 = sbr.rel target = $region3
    $region8: #{tpu_custom_call.1} parent=1 // loop_exit
      _
    %1350 = vsyncpa [#allocation3], 1
    %s1351 = scalar_lea.sflag [#allocation3], 1
    %1352 = vsyncpa %s1351, 1
    %1353 = vsyncpa [#allocation6], 1
    %1354 = vsyncpa [#allocation9], 1
    %1355 = vsyncpa [#allocation4], 1
    %s1356 = scalar_lea.sflag [#allocation4], 1
    %1357 = vsyncpa %s1356, 1

</llo_original>
